<compile_context>
chip_gen: v7x
topology: tpu7x:2x2x1
jax: 0.10.0
libtpu: 0.0.40
codegen_flags: <defaults>
</compile_context>

<pallas_src>
from dataclasses import dataclass
from typing import Any

import jax
import jax.numpy as jnp
from jax.experimental import pallas as pl
from jax.experimental.pallas import tpu as pltpu


@dataclass
class PathOutput:
    geometric_path: Any
    potential_path: Any
    velocity: Any = None
    force: Any = None
    times: Any = None


# Below this many T*D elements the whole problem stays gridless (one VMEM
# residency, no per-step overhead); above it we tile over T and pipeline.
_SMALL_ELEMS = 128 * 1024
# Conservative double-buffered tile budget (fits v5e 16 MiB scoped default,
# v6e 32 MiB, v7x 32 MiB scoped / 64 MiB physical).
_TILE_VMEM_BUDGET = 8 * 1024 * 1024


def _make_kernel(emit_force: bool):
    """Kernel specialized at trace time on whether force is emitted."""

    def kernel(t_ref, p0_ref, p1_ref, *out_refs):
        # t_ref:  [TT, 1] times, p0_ref/p1_ref: [1, D] endpoints
        geo_ref, pes_ref = out_refs[0], out_refs[1]
        t = t_ref[...]                      # [TT, 1]
        p0 = p0_ref[...]                    # [1, D]
        delta = p1_ref[...] - p0            # [1, D]

        # geometric path: linear interpolation, broadcast [TT,1]*[1,D] -> [TT,D]
        geo = p0 + t * delta
        geo_ref[...] = geo

        # potential path: V(x) = sum_d x_d^2 (per-time scalar, kept as [TT,1])
        pes_ref[...] = jnp.sum(geo * geo, axis=-1, keepdims=True)

        if emit_force:
            # force = d( sum_t V(geo_t) ) / d geo = 2*geo
            # (same sign convention as torch.autograd.grad in BasePath.forward)
            out_refs[2][...] = 2.0 * geo

    return kernel


class BasePathPallas:
    def __init__(self, initial_point, final_point,
                 return_velocity=False, return_force=False):
        self.initial_point = jnp.asarray(initial_point, jnp.float32)
        self.final_point = jnp.asarray(final_point, jnp.float32)
        self.return_velocity = return_velocity
        self.return_force = return_force

    # ----------------------------------------------------------------- kernel
    def _call_pallas(self, t_col, emit_force):
        T = t_col.shape[0]
        D = self.initial_point.shape[-1]
        p0 = self.initial_point.reshape(1, D)
        p1 = self.final_point.reshape(1, D)
        kernel = _make_kernel(emit_force)

        n_big_outs = 2 if emit_force else 1         # geo (+ force)
        out_shape = [jax.ShapeDtypeStruct((T, D), jnp.float32),   # geometric_path
                     jax.ShapeDtypeStruct((T, 1), jnp.float32)]   # potential_path
        if emit_force:
            out_shape.append(jax.ShapeDtypeStruct((T, D), jnp.float32))
        out_shape = tuple(out_shape)

        cost = pl.CostEstimate(
            flops=6 * T * D,
            transcendentals=0,
            bytes_accessed=4 * (T + 2 * D + n_big_outs * T * D + T),
        )

        if T * D <= _SMALL_ELEMS:
            # Gridless fast path: single step, everything resident in VMEM.
            vmem = pl.BlockSpec(memory_space=pltpu.MemorySpace.VMEM)
            return pl.pallas_call(
                kernel,
                out_shape=out_shape,
                in_specs=[vmem, vmem, vmem],
                out_specs=tuple([vmem] * len(out_shape)),
                cost_estimate=cost,
            )(t_col, p0, p1)

        # Tiled path: 1-D grid over T, BlockSpec auto double-buffering.
        # Per-row double-buffered VMEM bytes: t(1) + big outs(D each) + pes(1).
        bytes_per_row = 2 * 4 * (1 + D * n_big_outs + 1)
        tt = max(8, min(1024, T, _TILE_VMEM_BUDGET // bytes_per_row))
        tt = (tt // 8) * 8                       # (8,128) sublane constraint
        grid = (pl.cdiv(T, tt),)

        in_specs = [
            pl.BlockSpec((tt, 1), lambda i: (i, 0)),   # times tile
            pl.BlockSpec((1, D), lambda i: (0, 0)),    # endpoints stay resident
            pl.BlockSpec((1, D), lambda i: (0, 0)),
        ]
        out_specs = [
            pl.BlockSpec((tt, D), lambda i: (i, 0)),   # geometric_path tile
            pl.BlockSpec((tt, 1), lambda i: (i, 0)),   # potential tile (same grid)
        ]
        if emit_force:
            out_specs.append(pl.BlockSpec((tt, D), lambda i: (i, 0)))

        return pl.pallas_call(
            kernel,
            out_shape=out_shape,
            grid=grid,
            in_specs=in_specs,
            out_specs=tuple(out_specs),
            cost_estimate=cost,
            compiler_params=pltpu.CompilerParams(
                dimension_semantics=("parallel",),   # shard tiles across TCs on v7x
                vmem_limit_bytes=32 * 1024 * 1024,
            ),
        )(t_col, p0, p1)

    # ---------------------------------------------------------------- forward
    def forward(self, t, return_velocity=False, return_force=False):
        times_in = jnp.asarray(t, jnp.float32)
        t_col = times_in
        if t_col.ndim == 0:
            t_col = t_col.reshape(1, 1)
        elif t_col.ndim == 1:
            t_col = t_col[:, None]
        T = t_col.shape[0]
        D = self.initial_point.shape[-1]

        emit_force = bool(self.return_force or return_force)
        emit_velocity = bool(self.return_velocity or return_velocity)

        outs = self._call_pallas(t_col, emit_force)
        geo = outs[0]
        pes = outs[1][:, 0]                       # [T], batched scalar potential
        force = outs[2] if emit_force else None

        velocity = None
        if emit_velocity:
            # d geo / dt = (final - initial); pure broadcast, no kernel writeback
            delta = (self.final_point - self.initial_point).reshape(1, D)
            velocity = jnp.broadcast_to(delta, (T, D))

        return PathOutput(geometric_path=geo, potential_path=pes,
                          velocity=velocity, force=force, times=times_in)

    def get_path(self, times=None, return_velocity=False, return_force=False):
        if times is None:
            times = jnp.linspace(0.0, 1.0, 1000, dtype=jnp.float32)[:, None]
        return self.forward(times, return_velocity=return_velocity,
                            return_force=return_force)

    __call__ = forward


def _reference(times, p0, p1):
    t_col = times[:, None]
    geo = p0[None, :] + t_col * (p1 - p0)[None, :]
    pes = jnp.sum(geo * geo, axis=-1)
    force = 2.0 * geo
    vel = jnp.broadcast_to((p1 - p0)[None, :], geo.shape)
    return geo, pes, force, vel


if __name__ == "__main__":
    key = jax.random.PRNGKey(0)
    k0, k1, kt, k2, k3, kt2 = jax.random.split(key, 6)

    # --- small case (gridless fast path): T=8 time samples, D=32 dims -------
    T, D = 8, 32
    p0 = jax.random.normal(k0, (D,), jnp.float32)
    p1 = jax.random.normal(k1, (D,), jnp.float32)
    times = jnp.sort(jax.random.uniform(kt, (T,), jnp.float32))

    path = BasePathPallas(p0, p1, return_velocity=True, return_force=True)
    out = path.forward(times)
    jax.block_until_ready(
        (out.geometric_path, out.potential_path, out.velocity, out.force))

    geo_r, pes_r, force_r, vel_r = _reference(times, p0, p1)
    assert jnp.allclose(out.geometric_path, geo_r, atol=1e-5)
    assert jnp.allclose(out.potential_path, pes_r, atol=1e-4)
    assert jnp.allclose(out.force, force_r, atol=1e-5)
    assert jnp.allclose(out.velocity, vel_r, atol=1e-5)

    # no force / no velocity requested -> force output not emitted at all
    path_plain = BasePathPallas(p0, p1)
    out_plain = path_plain.forward(times)
    jax.block_until_ready((out_plain.geometric_path, out_plain.potential_path))
    assert out_plain.force is None and out_plain.velocity is None
    assert jnp.allclose(out_plain.geometric_path, geo_r, atol=1e-5)

    # --- larger case (tiled/gridded path, exercises pipelining) -------------
    T2, D2 = 4096, 128
    p0b = jax.random.normal(k2, (D2,), jnp.float32)
    p1b = jax.random.normal(k3, (D2,), jnp.float32)
    times2 = jnp.sort(jax.random.uniform(kt2, (T2,), jnp.float32))

    path2 = BasePathPallas(p0b, p1b, return_force=True)
    out2 = path2.forward(times2)
    jax.block_until_ready((out2.geometric_path, out2.potential_path, out2.force))

    geo2_r, pes2_r, force2_r, _ = _reference(times2, p0b, p1b)
    assert jnp.allclose(out2.geometric_path, geo2_r, atol=1e-5)
    assert jnp.allclose(out2.potential_path, pes2_r, rtol=1e-4, atol=1e-3)
    assert jnp.allclose(out2.force, force2_r, atol=1e-5)

    print("KERNEL_OK")
</pallas_src>

<mosaic_0001>
module attributes {stable_mosaic.version = 11 : i64} {
  func.func @kernel(%arg0: memref<8x1xf32, #tpu.memory_space<vmem>>, %arg1: memref<1x32xf32, #tpu.memory_space<vmem>>, %arg2: memref<1x32xf32, #tpu.memory_space<vmem>>, %arg3: memref<8x32xf32, #tpu.memory_space<vmem>>, %arg4: memref<8x1xf32, #tpu.memory_space<vmem>>, %arg5: memref<8x32xf32, #tpu.memory_space<vmem>>) attributes {dimension_semantics = [], scalar_prefetch = 0 : i64, scratch_operands = 0 : i64, tpu.core_type = #tpu.core_type<tc>} {
    %c0 = arith.constant 0 : index
    %c0_0 = arith.constant 0 : index
    %0 = vector.load %arg0[%c0, %c0_0] : memref<8x1xf32, #tpu.memory_space<vmem>>, vector<8x1xf32>
    %c0_1 = arith.constant 0 : index
    %c0_2 = arith.constant 0 : index
    %1 = vector.load %arg1[%c0_1, %c0_2] : memref<1x32xf32, #tpu.memory_space<vmem>>, vector<1x32xf32>
    %c0_3 = arith.constant 0 : index
    %c0_4 = arith.constant 0 : index
    %2 = vector.load %arg2[%c0_3, %c0_4] : memref<1x32xf32, #tpu.memory_space<vmem>>, vector<1x32xf32>
    %3 = arith.subf %2, %1 : vector<1x32xf32>
    %4 = vector.broadcast %0 : vector<8x1xf32> to vector<8x32xf32>
    %5 = vector.broadcast %3 : vector<1x32xf32> to vector<8x32xf32>
    %6 = arith.mulf %4, %5 : vector<8x32xf32>
    %7 = vector.broadcast %1 : vector<1x32xf32> to vector<8x32xf32>
    %8 = arith.addf %7, %6 : vector<8x32xf32>
    %c0_5 = arith.constant 0 : index
    %c0_6 = arith.constant 0 : index
    %9 = vector.load %arg3[%c0_5, %c0_6] : memref<8x32xf32, #tpu.memory_space<vmem>>, vector<8x32xf32>
    tpu.vector_store %arg3[%c0_5, %c0_6], %8 {strides = array<i32>} : memref<8x32xf32, #tpu.memory_space<vmem>>, vector<8x32xf32>,
    %10 = arith.mulf %8, %8 : vector<8x32xf32>
    %cst = arith.constant dense<0.000000e+00> : vector<8xf32>
    %11 = vector.multi_reduction <add>, %10, %cst [1] : vector<8x32xf32> to vector<8xf32>
    %12 = vector.shape_cast %11 : vector<8xf32> to vector<8x1xf32>
    %c0_7 = arith.constant 0 : index
    %c0_8 = arith.constant 0 : index
    %13 = vector.load %arg4[%c0_7, %c0_8] : memref<8x1xf32, #tpu.memory_space<vmem>>, vector<8x1xf32>
    tpu.vector_store %arg4[%c0_7, %c0_8], %12 {strides = array<i32>} : memref<8x1xf32, #tpu.memory_space<vmem>>, vector<8x1xf32>,
    %cst_9 = arith.constant 2.000000e+00 : f32
    %14 = vector.broadcast %cst_9 : f32 to vector<8x32xf32>
    %15 = arith.mulf %14, %8 : vector<8x32xf32>
    %c0_10 = arith.constant 0 : index
    %c0_11 = arith.constant 0 : index
    %16 = vector.load %arg5[%c0_10, %c0_11] : memref<8x32xf32, #tpu.memory_space<vmem>>, vector<8x32xf32>
    tpu.vector_store %arg5[%c0_10, %c0_11], %15 {strides = array<i32>} : memref<8x32xf32, #tpu.memory_space<vmem>>, vector<8x32xf32>,
    return
  }
}

</mosaic_0001>

<llo_original>
// kernel: tpu_custom_call.1
$region0: #{tpu_custom_call.1}
  #allocation0 [shape = 'u32[]', space=smem, size = 0x4, offset = 0x4, fixed_abs, tag = 'smem constant byte address 0x4 - core index']
  #allocation1 [shape = 'u32[144,128]{1,0:T(1,128)}', space=vmem, size = 0x12000, scoped, tag = 'internal scratch']
  %s0 = inlined_call_operand.vmem [shape: f32[8,1], index: 0, kind: input, shape index: {}]
  %s1 = inlined_call_operand.vmem [shape: f32[1,32], index: 1, kind: input, shape index: {}]
  %s2 = inlined_call_operand.vmem [shape: f32[1,32], index: 2, kind: input, shape index: {}]
  %s3 = inlined_call_operand.hbm [shape: f32[8,32], index: 3, kind: output, shape index: {0}]
  %s4 = inlined_call_operand.vmem [shape: f32[8,1], index: 4, kind: output, shape index: {1}]
  %s5 = inlined_call_operand.hbm [shape: f32[8,32], index: 5, kind: output, shape index: {2}]
  %6 = xla_tuple %s3, %s4, %s5
  %s7 = sld [smem:[#allocation0]]
  $region38: #{tpu_custom_call.1} parent=0
    _
  %s9 = ssub.s32 1, %s7
  %s10 = scalar_select 0, %s9, %s7
  $region1: #{tpu_custom_call.1} parent=0
    #allocation2 [shape = 'u8[4096]{0}', space=vmem, size = 0x1000, scoped, tag = 'output window, operand 0, single buffered']
    #allocation3 [shape = 's32[1]{0}', space=sflag, size = 0x4, scoped, tag = 'scoped memory for tpu_custom_call.1']
    #allocation4 [shape = 'u8[4096]{0}', space=vmem, size = 0x1000, scoped, tag = 'output window, operand 2, single buffered']
    #allocation5 [shape = 's32[1]{0}', space=sflag, size = 0x4, scoped, tag = 'scoped memory for tpu_custom_call.1']
    %11 = vsyncpa [#allocation3], 0
    %12 = vsyncpa [#allocation5], 0
    // Predicated region
    $region2: #{tpu_custom_call.1} parent=1 // pred_check
      _
    $region3: #{tpu_custom_call.1} parent=1 // pred_check_branch
      %14 = sbr.rel (0) target = $region5
    $region4: #{tpu_custom_call.1} parent=1 // pred_region
      _
    $region5: #{tpu_custom_call.1} parent=1 // pred_fallthru
      _
    // Predicated region
    $region6: #{tpu_custom_call.1} parent=1 // pred_check
      _
    $region7: #{tpu_custom_call.1} parent=1 // pred_check_branch
      %16 = sbr.rel (0) target = $region9
    $region8: #{tpu_custom_call.1} parent=1 // pred_region
      _
    $region9: #{tpu_custom_call.1} parent=1 // pred_fallthru
      _
    // Predicated region
    $region10: #{tpu_custom_call.1} parent=1 // pred_check
      _
    $region11: #{tpu_custom_call.1} parent=1 // pred_check_branch
      %18 = sbr.rel (0) target = $region13
    $region12: #{tpu_custom_call.1} parent=1 // pred_region
      _
    $region13: #{tpu_custom_call.1} parent=1 // pred_fallthru
      _
    %v19 = vld [vmem:[%s0] sm:$0xff]
    %v20 = vld [vmem:[%s1] sm:$0x1]
    %v21 = vld [vmem:[%s2] sm:$0x1]
    %v22 = vsub.f32 %v21, %v20
    %24 = vset.pattern.permute.xlu0 0
    %25 = vperm.xlu0 %24, %v19
    %v26 = vpop.permute.xlu0 %25
    %v29 = vlaneseq
    %v30 = vshrl.u32 %v29, 7
    %v31 = vsub.s32 0, %v30
    %v32 = vrot.slane %v22, %v31
    %v34 = vmul.f32 %v26, %v32
    %v36 = vlaneseq
    %v37 = vshrl.u32 %v36, 7
    %v38 = vsub.s32 0, %v37
    %v39 = vrot.slane %v20, %v38
    %v41 = vadd.f32 %v39, %v34
    %vm42 = vcmask 261120
    %43 = vst.msk [vmem:[#allocation2] sm:$0xff] %vm42, %v41
    %v44 = vmul.f32 %v41, %v41
    %v45 = vsel %vm42, %v44, 0.0
    %46 = vadd.xlane.f32.xlu0 %v45
    %v47 = vpop.xlane.xlu0 %46
    %vm48 = vcmask 7168
    %49 = vst.msk [vmem:[%s4] sm:$0xff] %vm48, %v47
    %v50 = vmul.f32 %v41, 2.0
    %51 = vst.msk [vmem:[#allocation4] sm:$0xff] %vm42, %v50
    // Predicated region
    $region14: #{tpu_custom_call.1} parent=1 // pred_check
      _
    $region15: #{tpu_custom_call.1} parent=1 // pred_check_branch
      %53 = sbr.rel (0) target = $region17
    $region16: #{tpu_custom_call.1} parent=1 // pred_region
      %s55 = ssub.s32 128, 128
      %56 = vsyncadd [#allocation3], %s55
      %s58 = sshll.u32 [#allocation2], 4
      %s59 = int_to_ptr.vmem [resolvable:$true] %s58
      %61 = dma.vmem_to_hbm [thread:$0]  %s59, 128, %s3, [#allocation3]
    $region17: #{tpu_custom_call.1} parent=1 // pred_fallthru
      _
    // Predicated region
    $region18: #{tpu_custom_call.1} parent=1 // pred_check
      _
    $region19: #{tpu_custom_call.1} parent=1 // pred_check_branch
      %63 = sbr.rel (0) target = $region21
    $region20: #{tpu_custom_call.1} parent=1 // pred_region
      _
    $region21: #{tpu_custom_call.1} parent=1 // pred_fallthru
      _
    // Predicated region
    $region22: #{tpu_custom_call.1} parent=1 // pred_check
      _
    $region23: #{tpu_custom_call.1} parent=1 // pred_check_branch
      %65 = sbr.rel (0) target = $region25
    $region24: #{tpu_custom_call.1} parent=1 // pred_region
      %s67 = ssub.s32 128, 128
      %68 = vsyncadd [#allocation5], %s67
      %s70 = sshll.u32 [#allocation4], 4
      %s71 = int_to_ptr.vmem [resolvable:$true] %s70
      %73 = dma.vmem_to_hbm [thread:$0]  %s71, 128, %s5, [#allocation5]
    $region25: #{tpu_custom_call.1} parent=1 // pred_fallthru
      _
    // Predicated region
    $region26: #{tpu_custom_call.1} parent=1 // pred_check
      _
    $region27: #{tpu_custom_call.1} parent=1 // pred_check_branch
      %75 = sbr.rel (0) target = $region29
    $region28: #{tpu_custom_call.1} parent=1 // pred_region
      %76 = dma.done [#allocation3], 128
    $region29: #{tpu_custom_call.1} parent=1 // pred_fallthru
      _
    // Predicated region
    $region30: #{tpu_custom_call.1} parent=1 // pred_check
      _
    $region31: #{tpu_custom_call.1} parent=1 // pred_check_branch
      %78 = sbr.rel (0) target = $region33
    $region32: #{tpu_custom_call.1} parent=1 // pred_region
      _
    $region33: #{tpu_custom_call.1} parent=1 // pred_fallthru
      _
    // Predicated region
    $region34: #{tpu_custom_call.1} parent=1 // pred_check
      _
    $region35: #{tpu_custom_call.1} parent=1 // pred_check_branch
      %80 = sbr.rel (0) target = $region37
    $region36: #{tpu_custom_call.1} parent=1 // pred_region
      %81 = dma.done [#allocation5], 128
    $region37: #{tpu_custom_call.1} parent=1 // pred_fallthru
      _
    %82 = vsyncpa [#allocation3], 1
    %83 = vsyncpa [#allocation5], 1

</llo_original>
